<compile_context>
chip_gen: v7x
topology: tpu7x:2x2x1
jax: 0.10.0
libtpu: 0.0.40
codegen_flags: <defaults>
</compile_context>

<pallas_src>
import jax
import jax.numpy as jnp
from jax.experimental import pallas as pl
from jax.experimental.pallas import tpu as pltpu


def _round_up(x, m):
    return ((x + m - 1) // m) * m


def _make_center_loss_kernel(batch_tile, d_pad, batch_valid, batch_padded):
    """Kernel closure over static tile / padding sizes."""
    needs_mask = batch_valid != batch_padded

    def kernel(label_ref, feat_ref, centers_hbm, out_ref, cbuf, sem):
        i = pl.program_id(0)
        base = i * batch_tile

        # --- Gather centers[label[base + r]] (one row each) HBM -> VMEM. ---
        @pl.loop(0, batch_tile)
        def _issue(r):
            lab = label_ref[base + r]
            pltpu.make_async_copy(centers_hbm.at[lab], cbuf.at[r], sem.at[0]).start()

        @pl.loop(0, batch_tile)
        def _drain(r):
            # All row copies have identical size; each wait retires one of them.
            pltpu.make_async_copy(centers_hbm.at[0], cbuf.at[0], sem.at[0]).wait()

        # --- Squared-difference reduce (single streamed pass). ---
        diff = feat_ref[...] - cbuf[...]                         # (TB, D_pad) f32
        if needs_mask:
            row_ids = base + jax.lax.broadcasted_iota(jnp.int32, (batch_tile, 1), 0)
            diff = jnp.where(row_ids < batch_valid, diff, 0.0)   # zero padded rows
        sq = diff * diff

        # VALU-accumulate the D/128 lane groups, then ONE sublane reduce (XLU).
        acc = sq[:, 0:128]
        for g in range(1, d_pad // 128):
            acc = acc + sq[:, g * 128:(g + 1) * 128]
        out_ref[...] = (0.5 * jnp.sum(acc, axis=0, keepdims=True)).reshape(1, 1, 128)

    return kernel


def center_loss(label, feat, centers, *, batch_tile=None):
    """Forward of CenterLoss: sum((feat.reshape(B, -1) - centers[label])**2) / 2."""
    B = feat.shape[0]
    feat2d = jnp.reshape(feat, (B, -1)).astype(jnp.float32)
    D = feat2d.shape[1]
    C, Dc = centers.shape
    if D != Dc:
        raise ValueError(
            "Center's dim: {0} should be equal to input feature's dim: {1}".format(Dc, D))

    D_pad = _round_up(D, 128)

    # Batch tile: ~4 MiB f32 block (does not collapse to 8 rows for large D),
    # capped at ceil(B/2) so v7x megacore gets >= 2 parallel tiles when possible.
    if batch_tile is None:
        budget_rows = max(8, (4 * 1024 * 1024) // (4 * D_pad))
        batch_tile = min(budget_rows, 1024, _round_up(B, 8))
        if B >= 16:
            batch_tile = min(batch_tile, _round_up((B + 1) // 2, 8))
    batch_tile = max(8, _round_up(batch_tile, 8))

    B_pad = _round_up(B, batch_tile)
    num_bt = B_pad // batch_tile

    # Padding only when needed (jnp.pad). Padded labels = 0 (valid DMA index,
    # masked in-kernel); padded feature rows/cols are zero.
    label_p = label.astype(jnp.int32).reshape(B)
    if B_pad != B:
        label_p = jnp.pad(label_p, (0, B_pad - B))
    if B_pad != B or D_pad != D:
        feat_p = jnp.pad(feat2d, ((0, B_pad - B), (0, D_pad - D)))
    else:
        feat_p = feat2d
    centers_f = centers.astype(jnp.float32)
    centers_p = jnp.pad(centers_f, ((0, 0), (0, D_pad - D))) if D_pad != D else centers_f

    block_bytes = 4 * batch_tile * D_pad
    # 2x double-buffered feat + gather buffer + headroom; generous floor so the
    # v5e 16 MiB scoped default never binds, capped well under v7x's 64 MiB.
    vmem_limit = int(min(64 * 2**20, max(32 * 2**20, 4 * block_bytes + (4 << 20))))

    cost = pl.CostEstimate(
        flops=3 * B_pad * D_pad,
        transcendentals=0,
        bytes_accessed=4 * (2 * B_pad * D_pad   # feat stream + gathered centers
                            + B_pad             # labels
                            + num_bt * 128),    # lane-dense partials
    )

    kernel = _make_center_loss_kernel(batch_tile, D_pad, B, B_pad)

    partials = pl.pallas_call(
        kernel,
        out_shape=jax.ShapeDtypeStruct((num_bt, 1, 128), jnp.float32),
        grid_spec=pltpu.PrefetchScalarGridSpec(
            num_scalar_prefetch=1,                                        # labels -> SMEM
            grid=(num_bt,),
            in_specs=[
                pl.BlockSpec((batch_tile, D_pad), lambda i, lab: (i, 0)),  # feat (streamed)
                pl.BlockSpec(memory_space=pl.ANY),                         # centers stay in HBM
            ],
            out_specs=pl.BlockSpec((1, 1, 128), lambda i, lab: (i, 0, 0)),
            scratch_shapes=[
                pltpu.VMEM((batch_tile, D_pad), jnp.float32),              # gathered centers
                pltpu.SemaphoreType.DMA((1,)),
            ],
        ),
        compiler_params=pltpu.CompilerParams(
            dimension_semantics=("parallel",),
            vmem_limit_bytes=vmem_limit,
        ),
        cost_estimate=cost,
    )(label_p, feat_p, centers_p)

    # Tiny epilogue reduction (num_bt x 128 values) in plain JAX.
    return jnp.sum(partials)


if __name__ == "__main__":
    num_classes = 10
    feat_dim = 32
    batch = 24

    key = jax.random.PRNGKey(0)
    k_centers, k_feat, k_label = jax.random.split(key, 3)

    # Deterministic "parameter" init (torch.randn(num_classes, feat_dim) analogue).
    centers = jax.random.normal(k_centers, (num_classes, feat_dim), dtype=jnp.float32)
    feat = jax.random.normal(k_feat, (batch, feat_dim), dtype=jnp.float32)
    label = jax.random.randint(k_label, (batch,), 0, num_classes, dtype=jnp.int32)

    # Pure-JAX reference of the forward semantics.
    ref = 0.5 * jnp.sum((feat - centers[label]) ** 2)

    # Default auto-tiled path: 2 batch tiles of 16 rows (8 padded, masked rows).
    loss = jax.block_until_ready(center_loss(label, feat, centers))
    assert jnp.allclose(loss, ref, rtol=1e-5, atol=1e-5), (loss, ref)

    # Explicit small-tile path: 3 batch tiles of 8 rows, no padded rows.
    loss2 = jax.block_until_ready(center_loss(label, feat, centers, batch_tile=8))
    assert jnp.allclose(loss2, ref, rtol=1e-5, atol=1e-5), (loss2, ref)

    # Ragged batch / non-128 feature dim (exercises padding + row masking).
    ka, kb, kc = jax.random.split(jax.random.PRNGKey(1), 3)
    centers3 = jax.random.normal(ka, (7, 48), dtype=jnp.float32)
    feat3 = jax.random.normal(kb, (13, 48), dtype=jnp.float32)
    label3 = jax.random.randint(kc, (13,), 0, 7, dtype=jnp.int32)
    ref3 = 0.5 * jnp.sum((feat3 - centers3[label3]) ** 2)
    loss3 = jax.block_until_ready(center_loss(label3, feat3, centers3))
    assert jnp.allclose(loss3, ref3, rtol=1e-5, atol=1e-5), (loss3, ref3)

    print("KERNEL_OK")
</pallas_src>

<mosaic_0001>
module attributes {stable_mosaic.version = 11 : i64} {
  func.func @kernel(%arg0: i32, %arg1: memref<32xi32, #tpu.memory_space<smem>>, %arg2: memref<16x128xf32, #tpu.memory_space<vmem>>, %arg3: memref<10x128xf32, #tpu.memory_space<any>>, %arg4: memref<1x1x128xf32, #tpu.memory_space<vmem>>, %arg5: memref<16x128xf32, #tpu.memory_space<vmem>>, %arg6: memref<1x!tpu.dma_semaphore, #tpu.memory_space<semaphore_mem>>) attributes {dimension_semantics = [#tpu.dimension_semantics<parallel>], iteration_bounds = array<i64: 2>, scalar_prefetch = 1 : i64, scratch_operands = 2 : i64, tpu.core_type = #tpu.core_type<tc>, window_params = [{transform_indices = @transform_0, window_bounds = array<i64: 16, 128>}, {}, {transform_indices = @transform_2, window_bounds = array<i64: 1, 1, 128>}]} {
    %c16_i32 = arith.constant 16 : i32
    %0 = arith.muli %arg0, %c16_i32 : i32
    %c0_i32 = arith.constant 0 : i32
    %c16_i32_0 = arith.constant 16 : i32
    %1 = arith.addi %c0_i32, %c16_i32_0 : i32
    %c1_i32 = arith.constant 1 : i32
    scf.for %arg7 = %c0_i32 to %1 step %c1_i32  : i32 {
      %c1_i32_13 = arith.constant 1 : i32
      %22 = arith.muli %arg7, %c1_i32_13 : i32
      %c0_i32_14 = arith.constant 0 : i32
      %23 = arith.addi %c0_i32_14, %22 : i32
      %24 = arith.addi %0, %23 : i32
      %25 = arith.index_cast %24 : i32 to index
      %26 = memref.load %arg1[%25] : memref<32xi32, #tpu.memory_space<smem>>
      %c0_i32_15 = arith.constant 0 : i32
      %c0_i32_16 = arith.constant 0 : i32
      %27 = tpu.memref_slice %arg3[%26, %c0_i32_16] : memref<10x128xf32, #tpu.memory_space<any>> -> memref<1x128xf32, #tpu.memory_space<any>>
      %28 = tpu.memref_squeeze %27 : memref<1x128xf32, #tpu.memory_space<any>> -> memref<128xf32, #tpu.memory_space<any>>
      %c0_i32_17 = arith.constant 0 : i32
      %29 = tpu.memref_slice %arg5[%23, %c0_i32_17] : memref<16x128xf32, #tpu.memory_space<vmem>> -> memref<1x128xf32, #tpu.memory_space<vmem>>
      %30 = tpu.memref_squeeze %29 : memref<1x128xf32, #tpu.memory_space<vmem>> -> memref<128xf32, #tpu.memory_space<vmem>>
      %31 = tpu.memref_slice %arg6[%c0_i32_15] : memref<1x!tpu.dma_semaphore, #tpu.memory_space<semaphore_mem>> -> memref<1x!tpu.dma_semaphore, #tpu.memory_space<semaphore_mem>>
      %32 = tpu.memref_squeeze %31 : memref<1x!tpu.dma_semaphore, #tpu.memory_space<semaphore_mem>> -> memref<!tpu.dma_semaphore, #tpu.memory_space<semaphore_mem>>
      tpu.enqueue_dma source(%28 : memref<128xf32, #tpu.memory_space<any>>) target(%30 : memref<128xf32, #tpu.memory_space<vmem>>) target_semaphore(%32 : memref<!tpu.dma_semaphore, #tpu.memory_space<semaphore_mem>>)
    }
    %c16_i32_1 = arith.constant 16 : i32
    %c0_i32_2 = arith.constant 0 : i32
    %c16_i32_3 = arith.constant 16 : i32
    %2 = arith.addi %c0_i32_2, %c16_i32_3 : i32
    %c1_i32_4 = arith.constant 1 : i32
    scf.for %arg7 = %c0_i32_2 to %2 step %c1_i32_4  : i32 {
      %c0_i32_13 = arith.constant 0 : i32
      %c0_i32_14 = arith.constant 0 : i32
      %c0_i32_15 = arith.constant 0 : i32
      %c0_i32_16 = arith.constant 0 : i32
      %22 = tpu.memref_slice %arg3[%c0_i32_13, %c0_i32_16] : memref<10x128xf32, #tpu.memory_space<any>> -> memref<1x128xf32, #tpu.memory_space<any>>
      %23 = tpu.memref_squeeze %22 : memref<1x128xf32, #tpu.memory_space<any>> -> memref<128xf32, #tpu.memory_space<any>>
      %c0_i32_17 = arith.constant 0 : i32
      %24 = tpu.memref_slice %arg5[%c0_i32_14, %c0_i32_17] : memref<16x128xf32, #tpu.memory_space<vmem>> -> memref<1x128xf32, #tpu.memory_space<vmem>>
      %25 = tpu.memref_squeeze %24 : memref<1x128xf32, #tpu.memory_space<vmem>> -> memref<128xf32, #tpu.memory_space<vmem>>
      %26 = tpu.memref_slice %arg6[%c0_i32_15] : memref<1x!tpu.dma_semaphore, #tpu.memory_space<semaphore_mem>> -> memref<1x!tpu.dma_semaphore, #tpu.memory_space<semaphore_mem>>
      %27 = tpu.memref_squeeze %26 : memref<1x!tpu.dma_semaphore, #tpu.memory_space<semaphore_mem>> -> memref<!tpu.dma_semaphore, #tpu.memory_space<semaphore_mem>>
      tpu.wait_dma2 semaphore(%27 : memref<!tpu.dma_semaphore, #tpu.memory_space<semaphore_mem>>) src(%23 : memref<128xf32, #tpu.memory_space<any>>) dst(%25 : memref<128xf32, #tpu.memory_space<vmem>>)
    }
    %c0 = arith.constant 0 : index
    %c0_5 = arith.constant 0 : index
    %3 = vector.load %arg2[%c0, %c0_5] : memref<16x128xf32, #tpu.memory_space<vmem>>, vector<16x128xf32>
    %c0_6 = arith.constant 0 : index
    %c0_7 = arith.constant 0 : index
    %4 = vector.load %arg5[%c0_6, %c0_7] : memref<16x128xf32, #tpu.memory_space<vmem>>, vector<16x128xf32>
    %5 = arith.subf %3, %4 : vector<16x128xf32>
    %6 = tpu.iota {dimensions = array<i32: 0>} : vector<16x1xi32>
    %7 = vector.broadcast %0 : i32 to vector<16x1xi32>
    %8 = arith.addi %7, %6 : vector<16x1xi32>
    %c24_i32 = arith.constant 24 : i32
    %9 = vector.broadcast %c24_i32 : i32 to vector<16x1xi32>
    %10 = arith.cmpi slt, %8, %9 : vector<16x1xi32>
    %cst = arith.constant 0.000000e+00 : f32
    %11 = vector.shape_cast %10 : vector<16x1xi1> to vector<16x1xi1>
    %12 = vector.broadcast %11 : vector<16x1xi1> to vector<16x128xi1>
    %13 = vector.broadcast %cst : f32 to vector<16x128xf32>
    %14 = arith.select %12, %5, %13 : vector<16x128xi1>, vector<16x128xf32>
    %15 = arith.mulf %14, %14 : vector<16x128xf32>
    %cst_8 = arith.constant dense<0.000000e+00> : vector<128xf32>
    %16 = vector.multi_reduction <add>, %15, %cst_8 [0] : vector<16x128xf32> to vector<128xf32>
    %17 = vector.shape_cast %16 : vector<128xf32> to vector<1x128xf32>
    %cst_9 = arith.constant 5.000000e-01 : f32
    %18 = vector.broadcast %cst_9 : f32 to vector<1x128xf32>
    %19 = arith.mulf %18, %17 : vector<1x128xf32>
    %20 = vector.shape_cast %19 : vector<1x128xf32> to vector<1x1x128xf32>
    %c0_10 = arith.constant 0 : index
    %c0_11 = arith.constant 0 : index
    %c0_12 = arith.constant 0 : index
    %21 = vector.load %arg4[%c0_10, %c0_11, %c0_12] : memref<1x1x128xf32, #tpu.memory_space<vmem>>, vector<1x1x128xf32>
    tpu.vector_store %arg4[%c0_10, %c0_11, %c0_12], %20 {strides = array<i32>} : memref<1x1x128xf32, #tpu.memory_space<vmem>>, vector<1x1x128xf32>,
    return
  }
  func.func @transform_0(%arg0: i32, %arg1: memref<32xi32, #tpu.memory_space<smem>>) -> (i32, i32) {
    %c0_i32 = arith.constant 0 : i32
    %c0_i32_0 = arith.constant 0 : i32
    return %arg0, %c0_i32 : i32, i32
  }
  func.func @transform_2(%arg0: i32, %arg1: memref<32xi32, #tpu.memory_space<smem>>) -> (i32, i32, i32) {
    %c0_i32 = arith.constant 0 : i32
    %c0_i32_0 = arith.constant 0 : i32
    %c0_i32_1 = arith.constant 0 : i32
    return %arg0, %c0_i32, %c0_i32_0 : i32, i32, i32
  }
}

</mosaic_0001>

<llo_original>
// kernel: tpu_custom_call.1
$region0: #{tpu_custom_call.1}
  #allocation0 [shape = 'u32[]', space=smem, size = 0x4, offset = 0x4, fixed_abs, tag = 'smem constant byte address 0x4 - core index']
  #allocation1 [shape = 'u32[144,128]{1,0:T(1,128)}', space=vmem, size = 0x12000, scoped, tag = 'internal scratch']
  #allocation2 [shape = 'f32[16,128]{1,0:T(8,128)}', space=vmem, size = 0x2000, scoped, tag = 'scratch operand']
  #allocation3 [shape = 's32[1]{0}', space=sflag, size = 0x4, scoped, tag = 'scratch operand']
  #allocation4 [shape = 's32[1]{0}', space=sflag, size = 0x4, scoped, tag = 'scoped memory for tpu_custom_call.1']
  #allocation5 [shape = 'u8[512]{0}', space=smem, size = 0x200, scoped, tag = 'prefetched SMEM operand 0']
  #allocation10 [shape = 's32[]', space=sflag, size = 0x4, offset = 0, fixed_abs, tag = 'sflag constant byte address 0x0 - dummy sync flag']
  #allocation11 [shape = 's32[]', space=sflag, size = 0x4, offset = 0, fixed_abs, tag = 'sflag constant byte address 0x0 - dummy sync flag']
  #allocation12 [shape = 'u32[]', space=smem, size = 0x4, offset = 0x44, fixed_abs, tag = 'smem constant byte address 0x44 - assertion arg 0']
  #allocation13 [shape = 'u32[]', space=smem, size = 0x4, offset = 0x48, fixed_abs, tag = 'smem constant byte address 0x48 - assertion arg 1']
  %s0 = inlined_call_operand.hbm [shape: s32[32], index: 0, kind: input, shape index: {}]
  %s1 = inlined_call_operand.hbm [shape: f32[32,128], index: 1, kind: input, shape index: {}]
  %s2 = inlined_call_operand.hbm [shape: f32[10,128], index: 2, kind: input, shape index: {}]
  %s3 = inlined_call_operand.hbm [shape: f32[2,1,128], index: 3, kind: output, shape index: {}]
  %s4 = sld [smem:[#allocation0]]
  $region59: #{tpu_custom_call.1} parent=0
    _
  %s6 = ssub.s32 1, %s4
  %s7 = scalar_select 0, %s6, %s4
  %9 = dma.hbm_to_smem %s0, 16, [#allocation5], [#allocation4]
  %10 = dma.done [#allocation4], 16
  %11 = sfence
  $region1: #{tpu_custom_call.1} parent=0
    #allocation6 [shape = 'u8[16384]{0}', space=vmem, size = 0x4000, scoped, tag = 'input window, operand 1']
    #allocation7 [shape = 's32[2]{0}', space=sflag, size = 0x8, scoped, tag = 'scoped memory for tpu_custom_call.1']
    #allocation8 [shape = 's32[2]{0}', space=sflag, size = 0x8, scoped, tag = 'scoped memory for tpu_custom_call.1']
    #allocation9 [shape = 'u8[1024]{0}', space=vmem, size = 0x400, scoped, tag = 'output window, operand 0']
    %12 = vsyncpa [#allocation7], 0
    %s13 = scalar_lea.sflag [#allocation7], 1
    %14 = vsyncpa %s13, 0
    %15 = vsyncpa [#allocation8], 0
    %s16 = scalar_lea.sflag [#allocation8], 1
    %17 = vsyncpa %s16, 0
    loop: start=0, step=1, limit=4
    $region2: #{tpu_custom_call.1} parent=1 // loop_pre_header
      _
    $region3: #{tpu_custom_call.1} parent=1 // loop_header
      %s19 = sphi 0, %s23
      %p20 = scmp.ge.s32.totalorder %s19, 4
      %s29 = sphi 0, %s31
      %s32 = sphi 0, %s29
      %s33 = sphi 0, %s32
      %s49 = sphi 0, %s33
      %s55 = sphi 0, %s57
      %s58 = sphi 0, %s55
      %s59 = sphi 0, %s58
      %s75 = sphi 0, %s59
    $region4: #{tpu_custom_call.1} parent=1 // loop_header_branch
      %22 = sbr.rel (%p20) target = $region8
    $region5: #{tpu_custom_call.1} parent=1 // loop_body
      %s24 = ssub.s32 %s19, 1
      %s25 = ssub.s32 %s19, 2
      %s26 = sadd.s32 %s19, 1
      %s27 = ssub.s32 %s19, %s26
      %p28 = scmp.eq.s32.totalorder %s27, 0
      %s30 = sadd.s32 %s29, 1
      %s31 = scalar_select %p28, %s29, %s30
      %p34 = pneg %p28
      %p35 = scmp.eq.s32.totalorder %s19, 1
      %p36 = por %p34, %p35
      %p37 = scmp.ne.s32.totalorder %s29, %s32
      %p38 = scmp.eq.s32.totalorder %s19, 0
      %p39 = por %p37, %p38
      %p40 = scmp.ne.s32.totalorder %s29, %s32
      %p41 = scmp.eq.s32.totalorder %s24, 1
      %p42 = por %p40, %p41
      %p43 = scmp.ne.s32.totalorder %s32, %s33
      %p44 = scmp.eq.s32.totalorder %s24, 0
      %p45 = por %p43, %p44
      %p46 = scmp.ne.s32.totalorder %s32, %s33
      %p47 = scmp.eq.s32.totalorder %s25, 1
      %p48 = por %p46, %p47
      %p50 = scmp.ne.s32.totalorder %s33, %s49
      %p51 = scmp.eq.s32.totalorder %s25, 0
      %p52 = por %p50, %p51
      %s53 = ssub.s32 %s19, %s26
      %p54 = scmp.eq.s32.totalorder %s53, 0
      %s56 = sadd.s32 %s55, 1
      %s57 = scalar_select %p54, %s55, %s56
      %p60 = pneg %p54
      %p61 = scmp.eq.s32.totalorder %s19, 1
      %p62 = por %p60, %p61
      %p63 = scmp.ne.s32.totalorder %s55, %s58
      %p64 = scmp.eq.s32.totalorder %s19, 0
      %p65 = por %p63, %p64
      %p66 = scmp.ne.s32.totalorder %s55, %s58
      %p67 = scmp.eq.s32.totalorder %s24, 1
      %p68 = por %p66, %p67
      %p69 = scmp.ne.s32.totalorder %s58, %s59
      %p70 = scmp.eq.s32.totalorder %s24, 0
      %p71 = por %p69, %p70
      %p72 = scmp.ne.s32.totalorder %s58, %s59
      %p73 = scmp.eq.s32.totalorder %s25, 1
      %p74 = por %p72, %p73
      %p76 = scmp.ne.s32.totalorder %s59, %s75
      %p77 = scmp.eq.s32.totalorder %s25, 0
      %p78 = por %p76, %p77
      %p79 = scmp.le.s32.totalorder 1, %s19
      %p80 = scmp.lt.s32.totalorder %s19, 3
      %p81 = pnand %p79, %p80
      %p82 = pneg %p81
      // Predicated region
      $region9: #{tpu_custom_call.1} parent=5 // pred_check
        _
      $region10: #{tpu_custom_call.1} parent=5 // pred_check_branch
        %84 = sbr.rel (%p81) target = $region12
      $region11: #{tpu_custom_call.1} parent=5 // pred_region
        %s85 = ssub.s32 %s19, 1
      $region12: #{tpu_custom_call.1} parent=5 // pred_fallthru
        _
      %p86 = scmp.lt.s32.totalorder %s19, 2
      // Predicated region
      $region13: #{tpu_custom_call.1} parent=5 // pred_check
        %p87 = pneg %p86
      $region14: #{tpu_custom_call.1} parent=5 // pred_check_branch
        %89 = sbr.rel (%p87) target = $region16
      $region15: #{tpu_custom_call.1} parent=5 // pred_region
        // Predicated region
        $region17: #{tpu_custom_call.1} parent=15 // pred_check
          %p90 = pneg %p39
        $region18: #{tpu_custom_call.1} parent=15 // pred_check_branch
          %92 = sbr.rel (%p90) target = $region20
        $region19: #{tpu_custom_call.1} parent=15 // pred_region
          %s93 = sand.u32 %s29, 1
          %s94 = scalar_lea.sflag [#allocation7], %s93
          %s95 = sand.u32 %s29, 1
          %s96 = smul.addr %s95, 16
          %s97 = scalar_lea.vmem [#allocation6], %s96
          %s98 = smul.u32 2, %s19
          %s100 = ssub.s32 256, 256
          %101 = vsyncadd %s94, %s100
          %s102 = smul.addr %s98, 128
          %s103 = scalar_lea.hbm %s1, %s102
          %s104 = sshll.u32 %s97, 4
          %s105 = int_to_ptr.vmem [resolvable:$true] %s104
          %110 = dma.hbm_to_vmem [thread:$0]  %s103, 256, %s105, %s94, 128, 128, 8
        $region20: #{tpu_custom_call.1} parent=15 // pred_fallthru
          _
      $region16: #{tpu_custom_call.1} parent=5 // pred_fallthru
        _
      %p111 = scmp.le.s32.totalorder 1, %s19
      %p112 = scmp.lt.s32.totalorder %s19, 3
      %p113 = pnand %p111, %p112
      %p114 = pneg %p113
      // Predicated region
      $region21: #{tpu_custom_call.1} parent=5 // pred_check
        _
      $region22: #{tpu_custom_call.1} parent=5 // pred_check_branch
        %116 = sbr.rel (%p113) target = $region24
      $region23: #{tpu_custom_call.1} parent=5 // pred_region
        %s117 = ssub.s32 %s19, 1
        %s118 = sand.u32 %s32, 1
        %s119 = scalar_lea.sflag [#allocation7], %s118
        %s120 = sand.u32 %s32, 1
        %s121 = smul.addr %s120, 16
        %s122 = scalar_lea.vmem [#allocation6], %s121
        // Predicated region
        $region25: #{tpu_custom_call.1} parent=23 // pred_check
          %p123 = pneg %p45
        $region26: #{tpu_custom_call.1} parent=23 // pred_check_branch
          %125 = sbr.rel (%p123) target = $region28
        $region27: #{tpu_custom_call.1} parent=23 // pred_region
          %126 = dma.done %s119, 256
        $region28: #{tpu_custom_call.1} parent=23 // pred_fallthru
          _
        %s127 = sand.u32 %s32, 1
        %s128 = scalar_lea.sflag [#allocation7], %s127
        %s129 = sand.u32 %s32, 1
        %s130 = smul.addr %s129, 16
        %s131 = scalar_lea.vmem [#allocation6], %s130
        %p132 = pneg %p45
        %p133 = pneg %p42
        %p134 = pneg %p71
        %p135 = pneg %p68
        %s136 = sand.u32 %s58, 1
        %s137 = scalar_lea.sflag [#allocation8], %s136
        %s138 = sand.u32 %s58, 1
        %s139 = scalar_lea.vmem [#allocation9], %s138
        %s140 = smul.u32 2, %s24
        %s141 = smul.u32 %s24, 16
        loop: start=0, step=1, limit=16
        $region29: #{tpu_custom_call.1} parent=23 // loop_pre_header
          _
        $region30: #{tpu_custom_call.1} parent=23 // loop_header
          %s143 = sphi 0, %s147
          %p144 = scmp.ge.s32.totalorder %s143, 16
        $region31: #{tpu_custom_call.1} parent=23 // loop_header_branch
          %146 = sbr.rel (%p144) target = $region35
        $region32: #{tpu_custom_call.1} parent=23 // loop_body
          %s148 = sadd.s32 %s141, %s143
          %s149 = sld [smem:[#allocation5 + %s148]]
          %s150 = smul.addr %s149, 16
          %s151 = scalar_lea.hbm %s2, %s150
          %s152 = scalar_lea.vmem [#allocation2], %s143
          // Predicated region
          $region36: #{tpu_custom_call.1} parent=32 // pred_check
            _
          $region37: #{tpu_custom_call.1} parent=32 // pred_check_branch
            %154 = sbr.rel target = $region39
          $region38: #{tpu_custom_call.1} parent=32 // pred_region
            %155 = sst [smem:[#allocation12]] [#allocation11]
            %156 = sst [smem:[#allocation13]] [#allocation10]
          $region39: #{tpu_custom_call.1} parent=32 // pred_fallthru
            _
          %158 = shalt.err (0)
          %s160 = sshll.u32 %s152, 4
          %s161 = int_to_ptr.vmem [resolvable:$true] %s160
          %163 = dma.hbm_to_vmem [thread:$0]  %s151, 16, %s161, [#allocation3]
        $region33: #{tpu_custom_call.1} parent=23 // loop_footer
          %s147 = sadd.s32 1, %s143
        $region34: #{tpu_custom_call.1} parent=23 // loop_footer_branch
          %142 = sbr.rel target = $region30
        $region35: #{tpu_custom_call.1} parent=23 // loop_exit
          _
        loop: start=0, step=1, limit=16
        $region40: #{tpu_custom_call.1} parent=23 // loop_pre_header
          _
        $region41: #{tpu_custom_call.1} parent=23 // loop_header
          %s165 = sphi 0, %s169
          %p166 = scmp.ge.s32.totalorder %s165, 16
        $region42: #{tpu_custom_call.1} parent=23 // loop_header_branch
          %168 = sbr.rel (%p166) target = $region46
        $region43: #{tpu_custom_call.1} parent=23 // loop_body
          %171 = dma.done [#allocation3], 16
        $region44: #{tpu_custom_call.1} parent=23 // loop_footer
          %s169 = sadd.s32 1, %s165
        $region45: #{tpu_custom_call.1} parent=23 // loop_footer_branch
          %164 = sbr.rel target = $region41
        $region46: #{tpu_custom_call.1} parent=23 // loop_exit
          _
        %v172 = vld [vmem:[%s122] sm:$0xff]
        %v173 = vld [vmem:[%s122 + $0x8] sm:$0xff]
        %v174 = vld [vmem:[#allocation2] sm:$0xff]
        %v175 = vld [vmem:[#allocation2 + $0x8] sm:$0xff]
        %v176 = vsub.f32 %v172, %v174
        %v177 = vsub.f32 %v173, %v175
        %v178 = vlaneseq
        %v179 = vshrl.u32 %v178, 7
        %v180 = vadd.s32 %v179, 8
        %v181 = vstv %s141
        %v182 = vadd.s32 %v181, %v179
        %v183 = vadd.s32 %v181, %v180
        %vm184 = vcmp.lt.s32.totalorder %v182, 24
        %vm185 = vcmp.lt.s32.totalorder %v183, 24
        %v186 = vsel %vm184, 1, 0
        %v187 = vsel %vm185, 1, 0
        %vm188 = vcmp.eq.s32.totalorder %v186, 1
        %vm189 = vcmp.eq.s32.totalorder %v187, 1
        %v190 = vsel %vm188, %v176, 0.0
        %v191 = vsel %vm189, %v177, 0.0
        %v192 = vmul.f32 %v190, %v190
        %v193 = vmul.f32 %v191, %v191
        %v194 = vadd.f32 %v192, %v193
        %v195 = vrot.slane %v194, 4
        %v196 = vadd.f32 %v194, %v195
        %v197 = vrot.slane %v196, 2
        %v198 = vadd.f32 %v196, %v197
        %v199 = vrot.slane %v198, 1
        %v200 = vadd.f32 %v198, %v199
        %v201 = vmul.f32 %v200, 0.5
        %202 = vst [vmem:[%s139] sm:$0x1] %v201
        %s203 = sand.u32 %s58, 1
        %s204 = scalar_lea.sflag [#allocation8], %s203
        %s205 = sand.u32 %s58, 1
        %s206 = scalar_lea.vmem [#allocation9], %s205
        // Predicated region
        $region47: #{tpu_custom_call.1} parent=23 // pred_check
          %p207 = pneg %p68
        $region48: #{tpu_custom_call.1} parent=23 // pred_check_branch
          %209 = sbr.rel (%p207) target = $region50
        $region49: #{tpu_custom_call.1} parent=23 // pred_region
          %s211 = ssub.s32 16, 16
          %212 = vsyncadd %s204, %s211
          %s213 = smul.addr %s24, 16
          %s214 = scalar_lea.hbm %s3, %s213
          %s216 = sshll.u32 %s206, 4
          %s217 = int_to_ptr.vmem [resolvable:$true] %s216
          %219 = dma.vmem_to_hbm [thread:$0]  %s217, 16, %s214, %s204
        $region50: #{tpu_custom_call.1} parent=23 // pred_fallthru
          _
      $region24: #{tpu_custom_call.1} parent=5 // pred_fallthru
        _
      %p220 = scmp.le.s32.totalorder 2, %s19
      // Predicated region
      $region51: #{tpu_custom_call.1} parent=5 // pred_check
        %p221 = pneg %p220
      $region52: #{tpu_custom_call.1} parent=5 // pred_check_branch
        %223 = sbr.rel (%p221) target = $region54
      $region53: #{tpu_custom_call.1} parent=5 // pred_region
        %s224 = ssub.s32 %s19, 2
        // Predicated region
        $region55: #{tpu_custom_call.1} parent=53 // pred_check
          %p225 = pneg %p74
        $region56: #{tpu_custom_call.1} parent=53 // pred_check_branch
          %227 = sbr.rel (%p225) target = $region58
        $region57: #{tpu_custom_call.1} parent=53 // pred_region
          %s228 = sand.u32 %s59, 1
          %s229 = scalar_lea.sflag [#allocation8], %s228
          %s230 = sand.u32 %s59, 1
          %s231 = scalar_lea.vmem [#allocation9], %s230
          %232 = dma.done %s229, 16
        $region58: #{tpu_custom_call.1} parent=53 // pred_fallthru
          _
      $region54: #{tpu_custom_call.1} parent=5 // pred_fallthru
        _
    $region6: #{tpu_custom_call.1} parent=1 // loop_footer
      %s23 = sadd.s32 1, %s19
    $region7: #{tpu_custom_call.1} parent=1 // loop_footer_branch
      %18 = sbr.rel target = $region3
    $region8: #{tpu_custom_call.1} parent=1 // loop_exit
      _
    %233 = vsyncpa [#allocation7], 1
    %s234 = scalar_lea.sflag [#allocation7], 1
    %235 = vsyncpa %s234, 1
    %236 = vsyncpa [#allocation8], 1
    %s237 = scalar_lea.sflag [#allocation8], 1
    %238 = vsyncpa %s237, 1
  %239 = vsyncmov [#allocation3]
  %s240 = vpop.sfrf %239
  %p241 = scmp.eq.s32.totalorder %s240, 0
  %p242 = pneg %p241
  %244 = shalt.err (%p242)

</llo_original>
